<compile_context>
chip_gen: v7x
topology: tpu7x:2x2x1
jax: 0.10.0
libtpu: 0.0.40
codegen_flags: <defaults>
</compile_context>

<pallas_src>
import jax
import jax.numpy as jnp
from jax.experimental import pallas as pl
from jax.experimental.pallas import tpu as pltpu

NUM_CLASSES = 100
PAD_CLASSES = 128        # lane-dense output width (multiple of 128)
D_IN = 512
_MIN_SPLIT_ROWS = 512    # don't force multi-core splits below this tile size


def texas_mlp_kernel(x_ref, w1_ref, b1_ref, w2_ref, b2_ref, w3_ref, b3_ref, o_ref):
    # Cast f32 input to bf16 in-kernel (VPU) so HBM only ever sees x once.
    x = x_ref[...].astype(jnp.bfloat16)
    # Linear(512->256) + Tanh   (bf16 MXU matmul, f32 accumulate/bias/tanh)
    h1 = jnp.tanh(
        jnp.dot(x, w1_ref[...], preferred_element_type=jnp.float32) + b1_ref[...]
    ).astype(jnp.bfloat16)
    # Linear(256->128) + Tanh
    h2 = jnp.tanh(
        jnp.dot(h1, w2_ref[...], preferred_element_type=jnp.float32) + b2_ref[...]
    ).astype(jnp.bfloat16)
    # classifier: Linear(128->128 padded), no activation; bf16 writeback.
    o_ref[...] = (
        jnp.dot(h2, w3_ref[...], preferred_element_type=jnp.float32) + b3_ref[...]
    ).astype(o_ref.dtype)


def _round_up(x, m):
    return (x + m - 1) // m * m


def _tensorcores_per_chip():
    """2 TensorCores on v7x; 1 on v5e/v6e (and other generations used here)."""
    try:
        kind = jax.devices()[0].device_kind.lower()
    except Exception:
        return 1
    return 2 if ("v7" in kind or "7x" in kind) else 1


def prepare_params(params):
    """Cast matmul weights to bf16 and pad the classifier to 128 lanes."""
    w1 = params["w1"].astype(jnp.bfloat16)                       # (512, 256)
    w2 = params["w2"].astype(jnp.bfloat16)                       # (256, 128)
    w3 = jnp.zeros((128, PAD_CLASSES), jnp.float32)
    w3 = w3.at[:, :NUM_CLASSES].set(params["w3"]).astype(jnp.bfloat16)
    b1 = params["b1"].astype(jnp.float32)                        # (1, 256)
    b2 = params["b2"].astype(jnp.float32)                        # (1, 128)
    b3 = jnp.zeros((1, PAD_CLASSES), jnp.float32)
    b3 = b3.at[:, :NUM_CLASSES].set(params["b3"])
    return {"w1": w1, "b1": b1, "w2": w2, "b2": b2, "w3": w3, "b3": b3}


def texas_classifier_forward(x, prepared, *, block_b=2048):
    """x: (B, 512) f32. prepared: output of prepare_params(). Returns (B, 100) f32."""
    B, d_in = x.shape
    assert d_in == D_IN

    bp8 = _round_up(B, 8)
    steps = pl.cdiv(bp8, block_b)

    # On 2-TensorCore chips (v7x) aim for >= 2 steps per core, but only when
    # the batch is large enough that tiles stay >= _MIN_SPLIT_ROWS rows.
    n_cores = _tensorcores_per_chip()
    if n_cores > 1 and steps < 2 * n_cores and bp8 >= 2 * n_cores * _MIN_SPLIT_ROWS:
        steps = 2 * n_cores

    if steps <= 1:
        blk = B  # full-array block: any B allowed, no padding, no masking
    else:
        blk = max(8, _round_up(pl.cdiv(bp8, steps), 8))

    grid_steps = pl.cdiv(B, blk)
    if grid_steps == 1:
        blk = B  # collapse back to a full-array block

    w1, b1 = prepared["w1"], prepared["b1"]
    w2, b2 = prepared["w2"], prepared["b2"]
    w3, b3 = prepared["w3"], prepared["b3"]

    full = lambda *_: (0, 0)  # weights/biases resident across all grid steps

    out = pl.pallas_call(
        texas_mlp_kernel,
        out_shape=jax.ShapeDtypeStruct((B, PAD_CLASSES), jnp.bfloat16),
        grid_spec=pltpu.PrefetchScalarGridSpec(
            num_scalar_prefetch=0,
            grid=(grid_steps,),
            in_specs=[
                pl.BlockSpec((blk, D_IN), lambda i: (i, 0)),   # f32 x, ragged last block OK
                pl.BlockSpec(w1.shape, full),
                pl.BlockSpec(b1.shape, full),
                pl.BlockSpec(w2.shape, full),
                pl.BlockSpec(b2.shape, full),
                pl.BlockSpec(w3.shape, full),
                pl.BlockSpec(b3.shape, full),
            ],
            out_specs=pl.BlockSpec((blk, PAD_CLASSES), lambda i: (i, 0)),
        ),
        compiler_params=pltpu.CompilerParams(
            dimension_semantics=("parallel",),
            vmem_limit_bytes=48 * 1024 * 1024,  # headroom for blk up to ~4096
        ),
    )(x, w1, b1, w2, b2, w3, b3)

    # Drop the 100->128 lane padding; hand back f32 logits (module semantics).
    return out[:, :NUM_CLASSES].astype(jnp.float32)


def init_params(key):
    """Deterministic synthetic parameters with PyTorch nn.Linear shapes,
    pre-transposed to (in, out) for the kernel."""
    ks = jax.random.split(key, 6)

    def lin(kw, kb, fan_in, fan_out):
        bound = 1.0 / jnp.sqrt(fan_in)
        w = jax.random.uniform(kw, (fan_in, fan_out), jnp.float32, -bound, bound)
        b = jax.random.uniform(kb, (1, fan_out), jnp.float32, -bound, bound)
        return w, b

    w1, b1 = lin(ks[0], ks[1], 512, 256)
    w2, b2 = lin(ks[2], ks[3], 256, 128)
    w3, b3 = lin(ks[4], ks[5], 128, NUM_CLASSES)
    return {"w1": w1, "b1": b1, "w2": w2, "b2": b2, "w3": w3, "b3": b3}


def reference_forward(x, p):
    h = jnp.tanh(x @ p["w1"] + p["b1"])
    h = jnp.tanh(h @ p["w2"] + p["b2"])
    return h @ p["w3"] + p["b3"]


if __name__ == "__main__":
    key = jax.random.PRNGKey(0)
    k_x1, k_x2, k_p = jax.random.split(key, 3)

    params = init_params(k_p)
    prepared = prepare_params(params)

    # Small-batch case: single grid step, full-array blocks, zero copies.
    B1 = 8
    x1 = jax.random.normal(k_x1, (B1, D_IN), jnp.float32)
    out1 = jax.block_until_ready(texas_classifier_forward(x1, prepared))
    ref1 = reference_forward(x1, params)
    assert out1.shape == (B1, NUM_CLASSES)
    # bf16 matmul inputs and bf16 writeback -> relaxed tolerance vs f32 reference.
    assert jnp.allclose(out1, ref1, atol=5e-2, rtol=5e-2), "mismatch vs reference (B=8)"

    # Ragged multi-step case: force a small tile so the grid has several steps
    # and a partial (masked) last block, with no padding copy in the wrapper.
    B2 = 300
    x2 = jax.random.normal(k_x2, (B2, D_IN), jnp.float32)
    out2 = jax.block_until_ready(texas_classifier_forward(x2, prepared, block_b=128))
    ref2 = reference_forward(x2, params)
    assert out2.shape == (B2, NUM_CLASSES)
    assert jnp.allclose(out2, ref2, atol=5e-2, rtol=5e-2), "mismatch vs reference (B=300)"

    print("KERNEL_OK")
</pallas_src>

<mosaic_0001>
module attributes {stable_mosaic.version = 11 : i64} {
  func.func @texas_mlp_kernel(%arg0: i32, %arg1: memref<8x512xf32, #tpu.memory_space<vmem>>, %arg2: memref<512x256xbf16, #tpu.memory_space<vmem>>, %arg3: memref<1x256xf32, #tpu.memory_space<vmem>>, %arg4: memref<256x128xbf16, #tpu.memory_space<vmem>>, %arg5: memref<1x128xf32, #tpu.memory_space<vmem>>, %arg6: memref<128x128xbf16, #tpu.memory_space<vmem>>, %arg7: memref<1x128xf32, #tpu.memory_space<vmem>>, %arg8: memref<8x128xbf16, #tpu.memory_space<vmem>>) attributes {dimension_semantics = [#tpu.dimension_semantics<parallel>], iteration_bounds = array<i64: 1>, scalar_prefetch = 0 : i64, scratch_operands = 0 : i64, tpu.core_type = #tpu.core_type<tc>, window_params = [{transform_indices = @transform_0, window_bounds = array<i64: 8, 512>}, {pipeline_mode = #tpu.pipeline_mode<synchronous>, transform_indices = @transform_1, window_bounds = array<i64: 512, 256>}, {pipeline_mode = #tpu.pipeline_mode<synchronous>, transform_indices = @transform_2, window_bounds = array<i64: 1, 256>}, {pipeline_mode = #tpu.pipeline_mode<synchronous>, transform_indices = @transform_3, window_bounds = array<i64: 256, 128>}, {pipeline_mode = #tpu.pipeline_mode<synchronous>, transform_indices = @transform_4, window_bounds = array<i64: 1, 128>}, {pipeline_mode = #tpu.pipeline_mode<synchronous>, transform_indices = @transform_5, window_bounds = array<i64: 128, 128>}, {pipeline_mode = #tpu.pipeline_mode<synchronous>, transform_indices = @transform_6, window_bounds = array<i64: 1, 128>}, {transform_indices = @transform_7, window_bounds = array<i64: 8, 128>}]} {
    %c0 = arith.constant 0 : index
    %c0_0 = arith.constant 0 : index
    %0 = vector.load %arg1[%c0, %c0_0] : memref<8x512xf32, #tpu.memory_space<vmem>>, vector<8x512xf32>
    %1 = arith.truncf %0 : vector<8x512xf32> to vector<8x512xbf16>
    %c0_1 = arith.constant 0 : index
    %c0_2 = arith.constant 0 : index
    %2 = vector.load %arg2[%c0_1, %c0_2] : memref<512x256xbf16, #tpu.memory_space<vmem>>, vector<512x256xbf16>
    %cst = arith.constant dense<0.000000e+00> : vector<8x256xf32>
    %3 = tpu.matmul %1, %2, %cst {dimension_numbers = #tpu.dot_dimension_numbers<[1], [0], [0], [1], [0, 0, 1, 1], [], []>} : vector<8x512xbf16>, vector<512x256xbf16>, vector<8x256xf32> -> vector<8x256xf32>
    %c0_3 = arith.constant 0 : index
    %c0_4 = arith.constant 0 : index
    %4 = vector.load %arg3[%c0_3, %c0_4] : memref<1x256xf32, #tpu.memory_space<vmem>>, vector<1x256xf32>
    %5 = vector.broadcast %4 : vector<1x256xf32> to vector<8x256xf32>
    %6 = arith.addf %3, %5 : vector<8x256xf32>
    %7 = math.tanh %6 : vector<8x256xf32>
    %8 = arith.truncf %7 : vector<8x256xf32> to vector<8x256xbf16>
    %c0_5 = arith.constant 0 : index
    %c0_6 = arith.constant 0 : index
    %9 = vector.load %arg4[%c0_5, %c0_6] : memref<256x128xbf16, #tpu.memory_space<vmem>>, vector<256x128xbf16>
    %cst_7 = arith.constant dense<0.000000e+00> : vector<8x128xf32>
    %10 = tpu.matmul %8, %9, %cst_7 {dimension_numbers = #tpu.dot_dimension_numbers<[1], [0], [0], [1], [0, 0, 1, 1], [], []>} : vector<8x256xbf16>, vector<256x128xbf16>, vector<8x128xf32> -> vector<8x128xf32>
    %c0_8 = arith.constant 0 : index
    %c0_9 = arith.constant 0 : index
    %11 = vector.load %arg5[%c0_8, %c0_9] : memref<1x128xf32, #tpu.memory_space<vmem>>, vector<1x128xf32>
    %12 = vector.broadcast %11 : vector<1x128xf32> to vector<8x128xf32>
    %13 = arith.addf %10, %12 : vector<8x128xf32>
    %14 = math.tanh %13 : vector<8x128xf32>
    %15 = arith.truncf %14 : vector<8x128xf32> to vector<8x128xbf16>
    %c0_10 = arith.constant 0 : index
    %c0_11 = arith.constant 0 : index
    %16 = vector.load %arg6[%c0_10, %c0_11] : memref<128x128xbf16, #tpu.memory_space<vmem>>, vector<128x128xbf16>
    %cst_12 = arith.constant dense<0.000000e+00> : vector<8x128xf32>
    %17 = tpu.matmul %15, %16, %cst_12 {dimension_numbers = #tpu.dot_dimension_numbers<[1], [0], [0], [1], [0, 0, 1, 1], [], []>} : vector<8x128xbf16>, vector<128x128xbf16>, vector<8x128xf32> -> vector<8x128xf32>
    %c0_13 = arith.constant 0 : index
    %c0_14 = arith.constant 0 : index
    %18 = vector.load %arg7[%c0_13, %c0_14] : memref<1x128xf32, #tpu.memory_space<vmem>>, vector<1x128xf32>
    %19 = vector.broadcast %18 : vector<1x128xf32> to vector<8x128xf32>
    %20 = arith.addf %17, %19 : vector<8x128xf32>
    %21 = arith.truncf %20 : vector<8x128xf32> to vector<8x128xbf16>
    %c0_15 = arith.constant 0 : index
    %c0_16 = arith.constant 0 : index
    %22 = vector.load %arg8[%c0_15, %c0_16] : memref<8x128xbf16, #tpu.memory_space<vmem>>, vector<8x128xbf16>
    tpu.vector_store %arg8[%c0_15, %c0_16], %21 {strides = array<i32>} : memref<8x128xbf16, #tpu.memory_space<vmem>>, vector<8x128xbf16>,
    return
  }
  func.func @transform_0(%arg0: i32) -> (i32, i32) {
    %c0_i32 = arith.constant 0 : i32
    %c0_i32_0 = arith.constant 0 : i32
    return %arg0, %c0_i32 : i32, i32
  }
  func.func @transform_1(%arg0: i32) -> (i32, i32) {
    %c0_i32 = arith.constant 0 : i32
    %c0_i32_0 = arith.constant 0 : i32
    %c0_i32_1 = arith.constant 0 : i32
    return %c0_i32, %c0_i32_0 : i32, i32
  }
  func.func @transform_2(%arg0: i32) -> (i32, i32) {
    %c0_i32 = arith.constant 0 : i32
    %c0_i32_0 = arith.constant 0 : i32
    %c0_i32_1 = arith.constant 0 : i32
    return %c0_i32, %c0_i32_0 : i32, i32
  }
  func.func @transform_3(%arg0: i32) -> (i32, i32) {
    %c0_i32 = arith.constant 0 : i32
    %c0_i32_0 = arith.constant 0 : i32
    %c0_i32_1 = arith.constant 0 : i32
    return %c0_i32, %c0_i32_0 : i32, i32
  }
  func.func @transform_4(%arg0: i32) -> (i32, i32) {
    %c0_i32 = arith.constant 0 : i32
    %c0_i32_0 = arith.constant 0 : i32
    %c0_i32_1 = arith.constant 0 : i32
    return %c0_i32, %c0_i32_0 : i32, i32
  }
  func.func @transform_5(%arg0: i32) -> (i32, i32) {
    %c0_i32 = arith.constant 0 : i32
    %c0_i32_0 = arith.constant 0 : i32
    %c0_i32_1 = arith.constant 0 : i32
    return %c0_i32, %c0_i32_0 : i32, i32
  }
  func.func @transform_6(%arg0: i32) -> (i32, i32) {
    %c0_i32 = arith.constant 0 : i32
    %c0_i32_0 = arith.constant 0 : i32
    %c0_i32_1 = arith.constant 0 : i32
    return %c0_i32, %c0_i32_0 : i32, i32
  }
  func.func @transform_7(%arg0: i32) -> (i32, i32) {
    %c0_i32 = arith.constant 0 : i32
    %c0_i32_0 = arith.constant 0 : i32
    return %arg0, %c0_i32 : i32, i32
  }
}

</mosaic_0001>

<llo_original>
// kernel: tpu_custom_call.1
$region0: #{tpu_custom_call.1}
  #allocation0 [shape = 'u32[]', space=smem, size = 0x4, offset = 0x4, fixed_abs, tag = 'smem constant byte address 0x4 - core index']
  #allocation1 [shape = 'u32[144,128]{1,0:T(1,128)}', space=vmem, size = 0x12000, scoped, tag = 'internal scratch']
  %s0 = inlined_call_operand.hbm [shape: f32[8,512], index: 0, kind: input, shape index: {}]
  %s1 = inlined_call_operand.hbm [shape: bf16[512,256], index: 1, kind: input, shape index: {}]
  %s2 = inlined_call_operand.vmem [shape: f32[1,256], index: 2, kind: input, shape index: {}]
  %s3 = inlined_call_operand.hbm [shape: bf16[256,128], index: 3, kind: input, shape index: {}]
  %s4 = inlined_call_operand.vmem [shape: f32[1,128], index: 4, kind: input, shape index: {}]
  %s5 = inlined_call_operand.hbm [shape: bf16[128,128], index: 5, kind: input, shape index: {}]
  %s6 = inlined_call_operand.vmem [shape: f32[1,128], index: 6, kind: input, shape index: {}]
  %s7 = inlined_call_operand.hbm [shape: bf16[8,128], index: 7, kind: output, shape index: {}]
  %s8 = sld [smem:[#allocation0]]
  $region54: #{tpu_custom_call.1} parent=0
    _
  %s10 = ssub.s32 1, %s8
  %s11 = scalar_select 0, %s10, %s8
  $region1: #{tpu_custom_call.1} parent=0
    #allocation2 [shape = 'u8[16384]{0}', space=vmem, size = 0x4000, scoped, tag = 'input window, operand 0, single buffered']
    #allocation3 [shape = 's32[1]{0}', space=sflag, size = 0x4, scoped, tag = 'scoped memory for tpu_custom_call.1']
    #allocation4 [shape = 's32[1]{0}', space=sflag, size = 0x4, scoped, tag = 'scoped memory for tpu_custom_call.1']
    #allocation5 [shape = 'u8[262144]{0}', space=vmem, size = 0x40000, scoped, tag = 'input window, operand 1, single buffered']
    #allocation6 [shape = 's32[1]{0}', space=sflag, size = 0x4, scoped, tag = 'scoped memory for tpu_custom_call.1']
    #allocation7 [shape = 'u8[65536]{0}', space=vmem, size = 0x10000, scoped, tag = 'input window, operand 3, single buffered']
    #allocation8 [shape = 'u8[32768]{0}', space=vmem, size = 0x8000, scoped, tag = 'input window, operand 5, single buffered']
    #allocation9 [shape = 's32[1]{0}', space=sflag, size = 0x4, scoped, tag = 'scoped memory for tpu_custom_call.1']
    #allocation10 [shape = 'u8[2048]{0}', space=vmem, size = 0x800, scoped, tag = 'output window, operand 0, single buffered']
    %12 = vsyncpa [#allocation3], 0
    %13 = vsyncpa [#allocation6], 0
    %14 = vsyncpa [#allocation9], 0
    %15 = vsyncpa [#allocation4], 0
    // Predicated region
    $region2: #{tpu_custom_call.1} parent=1 // pred_check
      _
    $region3: #{tpu_custom_call.1} parent=1 // pred_check_branch
      %17 = sbr.rel (0) target = $region5
    $region4: #{tpu_custom_call.1} parent=1 // pred_region
      %s19 = ssub.s32 512, 512
      %20 = vsyncadd [#allocation3], %s19
      %s22 = sshll.u32 [#allocation2], 4
      %s23 = int_to_ptr.vmem [resolvable:$true] %s22
      %25 = dma.hbm_to_vmem [thread:$0]  %s0, 512, %s23, [#allocation3]
    $region5: #{tpu_custom_call.1} parent=1 // pred_fallthru
      _
    // Predicated region
    $region6: #{tpu_custom_call.1} parent=1 // pred_check
      _
    $region7: #{tpu_custom_call.1} parent=1 // pred_check_branch
      %27 = sbr.rel (0) target = $region9
    $region8: #{tpu_custom_call.1} parent=1 // pred_region
      %s29 = ssub.s32 8192, 8192
      %30 = vsyncadd [#allocation6], %s29
      %s31 = sshll.u32 [#allocation5], 4
      %s32 = int_to_ptr.vmem [resolvable:$true] %s31
      %37 = dma.hbm_to_vmem [thread:$0]  %s1, 8192, %s32, [#allocation6], 128, 128, 8
    $region9: #{tpu_custom_call.1} parent=1 // pred_fallthru
      _
    // Predicated region
    $region10: #{tpu_custom_call.1} parent=1 // pred_check
      _
    $region11: #{tpu_custom_call.1} parent=1 // pred_check_branch
      %39 = sbr.rel (0) target = $region13
    $region12: #{tpu_custom_call.1} parent=1 // pred_region
      _
    $region13: #{tpu_custom_call.1} parent=1 // pred_fallthru
      _
    // Predicated region
    $region14: #{tpu_custom_call.1} parent=1 // pred_check
      _
    $region15: #{tpu_custom_call.1} parent=1 // pred_check_branch
      %41 = sbr.rel (0) target = $region17
    $region16: #{tpu_custom_call.1} parent=1 // pred_region
      %s43 = ssub.s32 2048, 2048
      %44 = vsyncadd [#allocation6], %s43
      %s45 = sshll.u32 [#allocation7], 4
      %s46 = int_to_ptr.vmem [resolvable:$true] %s45
      %51 = dma.hbm_to_vmem [thread:$0]  %s3, 2048, %s46, [#allocation6], 64, 64, 4
    $region17: #{tpu_custom_call.1} parent=1 // pred_fallthru
      _
    // Predicated region
    $region18: #{tpu_custom_call.1} parent=1 // pred_check
      _
    $region19: #{tpu_custom_call.1} parent=1 // pred_check_branch
      %53 = sbr.rel (0) target = $region21
    $region20: #{tpu_custom_call.1} parent=1 // pred_region
      _
    $region21: #{tpu_custom_call.1} parent=1 // pred_fallthru
      _
    // Predicated region
    $region22: #{tpu_custom_call.1} parent=1 // pred_check
      _
    $region23: #{tpu_custom_call.1} parent=1 // pred_check_branch
      %55 = sbr.rel (0) target = $region25
    $region24: #{tpu_custom_call.1} parent=1 // pred_region
      %s57 = ssub.s32 1024, 1024
      %58 = vsyncadd [#allocation9], %s57
      %s59 = sshll.u32 [#allocation8], 4
      %s60 = int_to_ptr.vmem [resolvable:$true] %s59
      %65 = dma.hbm_to_vmem [thread:$0]  %s5, 1024, %s60, [#allocation9], 64, 64, 4
    $region25: #{tpu_custom_call.1} parent=1 // pred_fallthru
      _
    // Predicated region
    $region26: #{tpu_custom_call.1} parent=1 // pred_check
      _
    $region27: #{tpu_custom_call.1} parent=1 // pred_check_branch
      %67 = sbr.rel (0) target = $region29
    $region28: #{tpu_custom_call.1} parent=1 // pred_region
      _
    $region29: #{tpu_custom_call.1} parent=1 // pred_fallthru
      _
    // Predicated region
    $region30: #{tpu_custom_call.1} parent=1 // pred_check
      _
    $region31: #{tpu_custom_call.1} parent=1 // pred_check_branch
      %69 = sbr.rel (0) target = $region33
    $region32: #{tpu_custom_call.1} parent=1 // pred_region
      %70 = dma.done [#allocation3], 512
    $region33: #{tpu_custom_call.1} parent=1 // pred_fallthru
      _
    // Predicated region
    $region34: #{tpu_custom_call.1} parent=1 // pred_check
      _
    $region35: #{tpu_custom_call.1} parent=1 // pred_check_branch
      %72 = sbr.rel (0) target = $region37
    $region36: #{tpu_custom_call.1} parent=1 // pred_region
      %73 = dma.done [#allocation6], 8192
    $region37: #{tpu_custom_call.1} parent=1 // pred_fallthru
      _
    // Predicated region
    $region38: #{tpu_custom_call.1} parent=1 // pred_check
      _
    $region39: #{tpu_custom_call.1} parent=1 // pred_check_branch
      %75 = sbr.rel (0) target = $region41
    $region40: #{tpu_custom_call.1} parent=1 // pred_region
      %76 = dma.done [#allocation6], 2048
    $region41: #{tpu_custom_call.1} parent=1 // pred_fallthru
      _
    // Predicated region
    $region42: #{tpu_custom_call.1} parent=1 // pred_check
      _
    $region43: #{tpu_custom_call.1} parent=1 // pred_check_branch
      %78 = sbr.rel (0) target = $region45
    $region44: #{tpu_custom_call.1} parent=1 // pred_region
      %79 = dma.done [#allocation9], 1024
    $region45: #{tpu_custom_call.1} parent=1 // pred_fallthru
      _
    %v81 = vld [vmem:[#allocation2] sm:$0xff]
    %v82 = vld [vmem:[#allocation2 + $0x8] sm:$0xff]
    %v83 = vld [vmem:[#allocation2 + $0x10] sm:$0xff]
    %v84 = vld [vmem:[#allocation2 + $0x18] sm:$0xff]
    %v85 = vpack.c.bf16 %v81, %v81
    %v86 = vpack.c.bf16 %v82, %v82
    %v87 = vpack.c.bf16 %v83, %v83
    %v88 = vpack.c.bf16 %v84, %v84
    %v89 = vld [vmem:[#allocation5] sm:$0xff]
    %v90 = vld [vmem:[#allocation5 + $0x8] sm:$0xff]
    %v91 = vld [vmem:[#allocation5 + $0x10] sm:$0xff]
    %v92 = vld [vmem:[#allocation5 + $0x18] sm:$0xff]
    %v93 = vld [vmem:[#allocation5 + $0x20] sm:$0xff]
    %v94 = vld [vmem:[#allocation5 + $0x28] sm:$0xff]
    %v95 = vld [vmem:[#allocation5 + $0x30] sm:$0xff]
    %v96 = vld [vmem:[#allocation5 + $0x38] sm:$0xff]
    %v97 = vld [vmem:[#allocation5 + $0x40] sm:$0xff]
    %v98 = vld [vmem:[#allocation5 + $0x48] sm:$0xff]
    %v99 = vld [vmem:[#allocation5 + $0x50] sm:$0xff]
    %v100 = vld [vmem:[#allocation5 + $0x58] sm:$0xff]
    %v101 = vld [vmem:[#allocation5 + $0x60] sm:$0xff]
    %v102 = vld [vmem:[#allocation5 + $0x68] sm:$0xff]
    %v103 = vld [vmem:[#allocation5 + $0x70] sm:$0xff]
    %v104 = vld [vmem:[#allocation5 + $0x78] sm:$0xff]
    %v105 = vld [vmem:[#allocation5 + $0x80] sm:$0xff]
    %v106 = vld [vmem:[#allocation5 + $0x88] sm:$0xff]
    %v107 = vld [vmem:[#allocation5 + $0x90] sm:$0xff]
    %v108 = vld [vmem:[#allocation5 + $0x98] sm:$0xff]
    %v109 = vld [vmem:[#allocation5 + $0xa0] sm:$0xff]
    %v110 = vld [vmem:[#allocation5 + $0xa8] sm:$0xff]
    %v111 = vld [vmem:[#allocation5 + $0xb0] sm:$0xff]
    %v112 = vld [vmem:[#allocation5 + $0xb8] sm:$0xff]
    %v113 = vld [vmem:[#allocation5 + $0xc0] sm:$0xff]
    %v114 = vld [vmem:[#allocation5 + $0xc8] sm:$0xff]
    %v115 = vld [vmem:[#allocation5 + $0xd0] sm:$0xff]
    %v116 = vld [vmem:[#allocation5 + $0xd8] sm:$0xff]
    %v117 = vld [vmem:[#allocation5 + $0xe0] sm:$0xff]
    %v118 = vld [vmem:[#allocation5 + $0xe8] sm:$0xff]
    %v119 = vld [vmem:[#allocation5 + $0xf0] sm:$0xff]
    %v120 = vld [vmem:[#allocation5 + $0xf8] sm:$0xff]
    %v121 = vld [vmem:[#allocation5 + $0x100] sm:$0xff]
    %v122 = vld [vmem:[#allocation5 + $0x108] sm:$0xff]
    %v123 = vld [vmem:[#allocation5 + $0x110] sm:$0xff]
    %v124 = vld [vmem:[#allocation5 + $0x118] sm:$0xff]
    %v125 = vld [vmem:[#allocation5 + $0x120] sm:$0xff]
    %v126 = vld [vmem:[#allocation5 + $0x128] sm:$0xff]
    %v127 = vld [vmem:[#allocation5 + $0x130] sm:$0xff]
    %v128 = vld [vmem:[#allocation5 + $0x138] sm:$0xff]
    %v129 = vld [vmem:[#allocation5 + $0x140] sm:$0xff]
    %v130 = vld [vmem:[#allocation5 + $0x148] sm:$0xff]
    %v131 = vld [vmem:[#allocation5 + $0x150] sm:$0xff]
    %v132 = vld [vmem:[#allocation5 + $0x158] sm:$0xff]
    %v133 = vld [vmem:[#allocation5 + $0x160] sm:$0xff]
    %v134 = vld [vmem:[#allocation5 + $0x168] sm:$0xff]
    %v135 = vld [vmem:[#allocation5 + $0x170] sm:$0xff]
    %v136 = vld [vmem:[#allocation5 + $0x178] sm:$0xff]
    %v137 = vld [vmem:[#allocation5 + $0x180] sm:$0xff]
    %v138 = vld [vmem:[#allocation5 + $0x188] sm:$0xff]
    %v139 = vld [vmem:[#allocation5 + $0x190] sm:$0xff]
    %v140 = vld [vmem:[#allocation5 + $0x198] sm:$0xff]
    %v141 = vld [vmem:[#allocation5 + $0x1a0] sm:$0xff]
    %v142 = vld [vmem:[#allocation5 + $0x1a8] sm:$0xff]
    %v143 = vld [vmem:[#allocation5 + $0x1b0] sm:$0xff]
    %v144 = vld [vmem:[#allocation5 + $0x1b8] sm:$0xff]
    %v145 = vld [vmem:[#allocation5 + $0x1c0] sm:$0xff]
    %v146 = vld [vmem:[#allocation5 + $0x1c8] sm:$0xff]
    %v147 = vld [vmem:[#allocation5 + $0x1d0] sm:$0xff]
    %v148 = vld [vmem:[#allocation5 + $0x1d8] sm:$0xff]
    %v149 = vld [vmem:[#allocation5 + $0x1e0] sm:$0xff]
    %v150 = vld [vmem:[#allocation5 + $0x1e8] sm:$0xff]
    %v151 = vld [vmem:[#allocation5 + $0x1f0] sm:$0xff]
    %v152 = vld [vmem:[#allocation5 + $0x1f8] sm:$0xff]
    %v153 = vld [vmem:[%s2] sm:$0x3]
    %v155 = vlaneseq
    %v156 = vshrl.u32 %v155, 7
    %v157 = vsub.s32 0, %v156
    %v158 = vrot.slane %v153, %v157
    %v159 = vlaneseq
    %v160 = vshrl.u32 %v159, 7
    %v161 = vsub.s32 1, %v160
    %v162 = vrot.slane %v153, %v161
    %v229 = vunpack.c.l.b16 %v89
    %v230 = vunpack.c.h.b16 %v89
    %v231 = vunpack.c.l.b16 %v90
    %v232 = vunpack.c.h.b16 %v90
    %v233 = vunpack.c.l.b16 %v91
    %v234 = vunpack.c.h.b16 %v91
    %v235 = vunpack.c.l.b16 %v92
    %v236 = vunpack.c.h.b16 %v92
    %v237 = vunpack.c.l.b16 %v93
    %v238 = vunpack.c.h.b16 %v93
    %v239 = vunpack.c.l.b16 %v94
    %v240 = vunpack.c.h.b16 %v94
    %v241 = vunpack.c.l.b16 %v95
    %v242 = vunpack.c.h.b16 %v95
    %v243 = vunpack.c.l.b16 %v96
    %v244 = vunpack.c.h.b16 %v96
    %v245 = vunpack.c.l.b16 %v97
    %v246 = vunpack.c.h.b16 %v97
    %v247 = vunpack.c.l.b16 %v98
    %v248 = vunpack.c.h.b16 %v98
    %v249 = vunpack.c.l.b16 %v99
    %v250 = vunpack.c.h.b16 %v99
    %v251 = vunpack.c.l.b16 %v100
    %v252 = vunpack.c.h.b16 %v100
    %v253 = vunpack.c.l.b16 %v101
    %v254 = vunpack.c.h.b16 %v101
    %v255 = vunpack.c.l.b16 %v102
    %v256 = vunpack.c.h.b16 %v102
    %v257 = vunpack.c.l.b16 %v103
    %v258 = vunpack.c.h.b16 %v103
    %v259 = vunpack.c.l.b16 %v104
    %v260 = vunpack.c.h.b16 %v104
    %v261 = vunpack.c.l.b16 %v105
    %v262 = vunpack.c.h.b16 %v105
    %v263 = vunpack.c.l.b16 %v106
    %v264 = vunpack.c.h.b16 %v106
    %v265 = vunpack.c.l.b16 %v107
    %v266 = vunpack.c.h.b16 %v107
    %v267 = vunpack.c.l.b16 %v108
    %v268 = vunpack.c.h.b16 %v108
    %v269 = vunpack.c.l.b16 %v109
    %v270 = vunpack.c.h.b16 %v109
    %v271 = vunpack.c.l.b16 %v110
    %v272 = vunpack.c.h.b16 %v110
    %v273 = vunpack.c.l.b16 %v111
    %v274 = vunpack.c.h.b16 %v111
    %v275 = vunpack.c.l.b16 %v112
    %v276 = vunpack.c.h.b16 %v112
    %v277 = vunpack.c.l.b16 %v113
    %v278 = vunpack.c.h.b16 %v113
    %v279 = vunpack.c.l.b16 %v114
    %v280 = vunpack.c.h.b16 %v114
    %v281 = vunpack.c.l.b16 %v115
    %v282 = vunpack.c.h.b16 %v115
    %v283 = vunpack.c.l.b16 %v116
    %v284 = vunpack.c.h.b16 %v116
    %v285 = vunpack.c.l.b16 %v117
    %v286 = vunpack.c.h.b16 %v117
    %v287 = vunpack.c.l.b16 %v118
    %v288 = vunpack.c.h.b16 %v118
    %v289 = vunpack.c.l.b16 %v119
    %v290 = vunpack.c.h.b16 %v119
    %v291 = vunpack.c.l.b16 %v120
    %v292 = vunpack.c.h.b16 %v120
    %v293 = vunpack.c.l.b16 %v121
    %v294 = vunpack.c.h.b16 %v121
    %v295 = vunpack.c.l.b16 %v122
    %v296 = vunpack.c.h.b16 %v122
    %v297 = vunpack.c.l.b16 %v123
    %v298 = vunpack.c.h.b16 %v123
    %v299 = vunpack.c.l.b16 %v124
    %v300 = vunpack.c.h.b16 %v124
    %v301 = vunpack.c.l.b16 %v125
    %v302 = vunpack.c.h.b16 %v125
    %v303 = vunpack.c.l.b16 %v126
    %v304 = vunpack.c.h.b16 %v126
    %v305 = vunpack.c.l.b16 %v127
    %v306 = vunpack.c.h.b16 %v127
    %v307 = vunpack.c.l.b16 %v128
    %v308 = vunpack.c.h.b16 %v128
    %v309 = vunpack.c.l.b16 %v129
    %v310 = vunpack.c.h.b16 %v129
    %v311 = vunpack.c.l.b16 %v130
    %v312 = vunpack.c.h.b16 %v130
    %v313 = vunpack.c.l.b16 %v131
    %v314 = vunpack.c.h.b16 %v131
    %v315 = vunpack.c.l.b16 %v132
    %v316 = vunpack.c.h.b16 %v132
    %v317 = vunpack.c.l.b16 %v133
    %v318 = vunpack.c.h.b16 %v133
    %v319 = vunpack.c.l.b16 %v134
    %v320 = vunpack.c.h.b16 %v134
    %v321 = vunpack.c.l.b16 %v135
    %v322 = vunpack.c.h.b16 %v135
    %v323 = vunpack.c.l.b16 %v136
    %v324 = vunpack.c.h.b16 %v136
    %v325 = vunpack.c.l.b16 %v137
    %v326 = vunpack.c.h.b16 %v137
    %v327 = vunpack.c.l.b16 %v138
    %v328 = vunpack.c.h.b16 %v138
    %v329 = vunpack.c.l.b16 %v139
    %v330 = vunpack.c.h.b16 %v139
    %v331 = vunpack.c.l.b16 %v140
    %v332 = vunpack.c.h.b16 %v140
    %v333 = vunpack.c.l.b16 %v141
    %v334 = vunpack.c.h.b16 %v141
    %v335 = vunpack.c.l.b16 %v142
    %v336 = vunpack.c.h.b16 %v142
    %v337 = vunpack.c.l.b16 %v143
    %v338 = vunpack.c.h.b16 %v143
    %v339 = vunpack.c.l.b16 %v144
    %v340 = vunpack.c.h.b16 %v144
    %v341 = vunpack.c.l.b16 %v145
    %v342 = vunpack.c.h.b16 %v145
    %v343 = vunpack.c.l.b16 %v146
    %v344 = vunpack.c.h.b16 %v146
    %v345 = vunpack.c.l.b16 %v147
    %v346 = vunpack.c.h.b16 %v147
    %v347 = vunpack.c.l.b16 %v148
    %v348 = vunpack.c.h.b16 %v148
    %v349 = vunpack.c.l.b16 %v149
    %v350 = vunpack.c.h.b16 %v149
    %v351 = vunpack.c.l.b16 %v150
    %v352 = vunpack.c.h.b16 %v150
    %v353 = vunpack.c.l.b16 %v151
    %v354 = vunpack.c.h.b16 %v151
    %v355 = vunpack.c.l.b16 %v152
    %v356 = vunpack.c.h.b16 %v152
    %v357 = vpack.c.b16 %v231, %v229
    %v358 = vpack.c.b16 %v232, %v230
    %v359 = vpack.c.b16 %v235, %v233
    %v360 = vpack.c.b16 %v236, %v234
    %v361 = vpack.c.b16 %v239, %v237
    %v362 = vpack.c.b16 %v240, %v238
    %v363 = vpack.c.b16 %v243, %v241
    %v364 = vpack.c.b16 %v244, %v242
    %v365 = vpack.c.b16 %v247, %v245
    %v366 = vpack.c.b16 %v248, %v246
    %v367 = vpack.c.b16 %v251, %v249
    %v368 = vpack.c.b16 %v252, %v250
    %v369 = vpack.c.b16 %v255, %v253
    %v370 = vpack.c.b16 %v256, %v254
    %v371 = vpack.c.b16 %v259, %v257
    %v372 = vpack.c.b16 %v260, %v258
    %v373 = vpack.c.b16 %v263, %v261
    %v374 = vpack.c.b16 %v264, %v262
    %v375 = vpack.c.b16 %v267, %v265
    %v376 = vpack.c.b16 %v268, %v266
    %v377 = vpack.c.b16 %v271, %v269
    %v378 = vpack.c.b16 %v272, %v270
    %v379 = vpack.c.b16 %v275, %v273
    %v380 = vpack.c.b16 %v276, %v274
    %v381 = vpack.c.b16 %v279, %v277
    %v382 = vpack.c.b16 %v280, %v278
    %v383 = vpack.c.b16 %v283, %v281
    %v384 = vpack.c.b16 %v284, %v282
    %v385 = vpack.c.b16 %v287, %v285
    %v386 = vpack.c.b16 %v288, %v286
    %v387 = vpack.c.b16 %v291, %v289
    %v388 = vpack.c.b16 %v292, %v290
    %v389 = vpack.c.b16 %v295, %v293
    %v390 = vpack.c.b16 %v296, %v294
    %v391 = vpack.c.b16 %v299, %v297
    %v392 = vpack.c.b16 %v300, %v298
    %v393 = vpack.c.b16 %v303, %v301
    %v394 = vpack.c.b16 %v304, %v302
    %v395 = vpack.c.b16 %v307, %v305
    %v396 = vpack.c.b16 %v308, %v306
    %v397 = vpack.c.b16 %v311, %v309
    %v398 = vpack.c.b16 %v312, %v310
    %v399 = vpack.c.b16 %v315, %v313
    %v400 = vpack.c.b16 %v316, %v314
    %v401 = vpack.c.b16 %v319, %v317
    %v402 = vpack.c.b16 %v320, %v318
    %v403 = vpack.c.b16 %v323, %v321
    %v404 = vpack.c.b16 %v324, %v322
    %v405 = vpack.c.b16 %v327, %v325
    %v406 = vpack.c.b16 %v328, %v326
    %v407 = vpack.c.b16 %v331, %v329
    %v408 = vpack.c.b16 %v332, %v330
    %v409 = vpack.c.b16 %v335, %v333
    %v410 = vpack.c.b16 %v336, %v334
    %v411 = vpack.c.b16 %v339, %v337
    %v412 = vpack.c.b16 %v340, %v338
    %v413 = vpack.c.b16 %v343, %v341
    %v414 = vpack.c.b16 %v344, %v342
    %v415 = vpack.c.b16 %v347, %v345
    %v416 = vpack.c.b16 %v348, %v346
    %v417 = vpack.c.b16 %v351, %v349
    %v418 = vpack.c.b16 %v352, %v350
    %v419 = vpack.c.b16 %v355, %v353
    %v420 = vpack.c.b16 %v356, %v354
    %485 = vmatprep.subr.bf16.mxu0 %v358
    %486 = vmatpush1.bf16.msra.mxu0 %v357
    %487 = vmatprep.subr.bf16.mxu0 %v360
    %488 = vmatpush1.bf16.msra.mxu0 %v359
    %489 = vmatprep.subr.bf16.mxu0 %v362
    %490 = vmatpush1.bf16.msra.mxu0 %v361
    %491 = vmatprep.subr.bf16.mxu0 %v364
    %492 = vmatpush1.bf16.msra.mxu0 %v363
    %493 = vmatprep.subr.bf16.mxu0 %v366
    %494 = vmatpush1.bf16.msra.mxu0 %v365
    %495 = vmatprep.subr.bf16.mxu0 %v368
    %496 = vmatpush1.bf16.msra.mxu0 %v367
    %497 = vmatprep.subr.bf16.mxu0 %v370
    %498 = vmatpush1.bf16.msra.mxu0 %v369
    %499 = vmatprep.subr.bf16.mxu0 %v372
    %500 = vmatpush1.bf16.msra.mxu0 %v371
    %501 = vmatprep.subr.bf16.mxu0 %v374
    %502 = vmatpush1.bf16.msra.mxu0 %v373
    %503 = vmatprep.subr.bf16.mxu0 %v376
    %504 = vmatpush1.bf16.msra.mxu0 %v375
    %505 = vmatprep.subr.bf16.mxu0 %v378
    %506 = vmatpush1.bf16.msra.mxu0 %v377
    %507 = vmatprep.subr.bf16.mxu0 %v380
    %508 = vmatpush1.bf16.msra.mxu0 %v379
    %509 = vmatprep.subr.bf16.mxu0 %v382
    %510 = vmatpush1.bf16.msra.mxu0 %v381
    %511 = vmatprep.subr.bf16.mxu0 %v384
    %512 = vmatpush1.bf16.msra.mxu0 %v383
    %513 = vmatprep.subr.bf16.mxu0 %v386
    %514 = vmatpush1.bf16.msra.mxu0 %v385
    %515 = vmatprep.subr.bf16.mxu0 %v388
    %516 = vmatpush1.bf16.msra.mxu0 %v387
    %517 = vmatprep.mubr.bf16.mxu0 %v86
    %518 = vmatmul.mubr.bf16.gmra.mrb[0].mxu0 %v85
    %v519 = vpop.f32.mrb[0].mxu0
    %v520 = vadd.f32 %v158, %v519
    %v521 = vpop.f32.mrb[0].mxu0
    %v522 = vadd.f32 %v162, %v521
    %v523 = vpop.f32.mrb[0].mxu0
    %v524 = vpop.f32.mrb[0].mxu0
    %525 = vdwg.mxu0
    %526 = vmatprep.subr.bf16.mxu0 %v390
    %527 = vmatpush1.bf16.msra.mxu0 %v389
    %528 = vmatprep.subr.bf16.mxu0 %v392
    %529 = vmatpush1.bf16.msra.mxu0 %v391
    %530 = vmatprep.subr.bf16.mxu0 %v394
    %531 = vmatpush1.bf16.msra.mxu0 %v393
    %532 = vmatprep.subr.bf16.mxu0 %v396
    %533 = vmatpush1.bf16.msra.mxu0 %v395
    %534 = vmatprep.subr.bf16.mxu0 %v398
    %535 = vmatpush1.bf16.msra.mxu0 %v397
    %536 = vmatprep.subr.bf16.mxu0 %v400
    %537 = vmatpush1.bf16.msra.mxu0 %v399
    %538 = vmatprep.subr.bf16.mxu0 %v402
    %539 = vmatpush1.bf16.msra.mxu0 %v401
    %540 = vmatprep.subr.bf16.mxu0 %v404
    %541 = vmatpush1.bf16.msra.mxu0 %v403
    %542 = vmatprep.subr.bf16.mxu0 %v406
    %543 = vmatpush1.bf16.msra.mxu0 %v405
    %544 = vmatprep.subr.bf16.mxu0 %v408
    %545 = vmatpush1.bf16.msra.mxu0 %v407
    %546 = vmatprep.subr.bf16.mxu0 %v410
    %547 = vmatpush1.bf16.msra.mxu0 %v409
    %548 = vmatprep.subr.bf16.mxu0 %v412
    %549 = vmatpush1.bf16.msra.mxu0 %v411
    %550 = vmatprep.subr.bf16.mxu0 %v414
    %551 = vmatpush1.bf16.msra.mxu0 %v413
    %552 = vmatprep.subr.bf16.mxu0 %v416
    %553 = vmatpush1.bf16.msra.mxu0 %v415
    %554 = vmatprep.subr.bf16.mxu0 %v418
    %555 = vmatpush1.bf16.msra.mxu0 %v417
    %556 = vmatprep.subr.bf16.mxu0 %v420
    %557 = vmatpush1.bf16.msra.mxu0 %v419
    %558 = vmatprep.mubr.bf16.mxu0 %v88
    %559 = vmatmul.mubr.bf16.gmra.mrb[0].mxu0 %v87
    %v560 = vpop.f32.mrb[0].mxu0
    %v561 = vadd.f32 %v520, %v560
    %v562 = vpop.f32.mrb[0].mxu0
    %v563 = vadd.f32 %v522, %v562
    %v564 = vpop.f32.mrb[0].mxu0
    %v565 = vpop.f32.mrb[0].mxu0
    %566 = vdwg.mxu0
    %v567 = vtanh.pop %v561
    %v568 = vtanh.pop %v563
    %v569 = vpack.c.bf16 %v567, %v567
    %v570 = vpack.c.bf16 %v568, %v568
    %v571 = vld [vmem:[#allocation7] sm:$0xf]
    %v572 = vld [vmem:[#allocation7 + $0x4] sm:$0xf]
    %v573 = vld [vmem:[#allocation7 + $0x8] sm:$0xf]
    %v574 = vld [vmem:[#allocation7 + $0xc] sm:$0xf]
    %v575 = vld [vmem:[#allocation7 + $0x10] sm:$0xf]
    %v576 = vld [vmem:[#allocation7 + $0x14] sm:$0xf]
    %v577 = vld [vmem:[#allocation7 + $0x18] sm:$0xf]
    %v578 = vld [vmem:[#allocation7 + $0x1c] sm:$0xf]
    %v579 = vld [vmem:[#allocation7 + $0x20] sm:$0xf]
    %v580 = vld [vmem:[#allocation7 + $0x24] sm:$0xf]
    %v581 = vld [vmem:[#allocation7 + $0x28] sm:$0xf]
    %v582 = vld [vmem:[#allocation7 + $0x2c] sm:$0xf]
    %v583 = vld [vmem:[#allocation7 + $0x30] sm:$0xf]
    %v584 = vld [vmem:[#allocation7 + $0x34] sm:$0xf]
    %v585 = vld [vmem:[#allocation7 + $0x38] sm:$0xf]
    %v586 = vld [vmem:[#allocation7 + $0x3c] sm:$0xf]
    %v587 = vld [vmem:[#allocation7 + $0x40] sm:$0xf]
    %v588 = vld [vmem:[#allocation7 + $0x44] sm:$0xf]
    %v589 = vld [vmem:[#allocation7 + $0x48] sm:$0xf]
    %v590 = vld [vmem:[#allocation7 + $0x4c] sm:$0xf]
    %v591 = vld [vmem:[#allocation7 + $0x50] sm:$0xf]
    %v592 = vld [vmem:[#allocation7 + $0x54] sm:$0xf]
    %v593 = vld [vmem:[#allocation7 + $0x58] sm:$0xf]
    %v594 = vld [vmem:[#allocation7 + $0x5c] sm:$0xf]
    %v595 = vld [vmem:[#allocation7 + $0x60] sm:$0xf]
    %v596 = vld [vmem:[#allocation7 + $0x64] sm:$0xf]
    %v597 = vld [vmem:[#allocation7 + $0x68] sm:$0xf]
    %v598 = vld [vmem:[#allocation7 + $0x6c] sm:$0xf]
    %v599 = vld [vmem:[#allocation7 + $0x70] sm:$0xf]
    %v600 = vld [vmem:[#allocation7 + $0x74] sm:$0xf]
    %v601 = vld [vmem:[#allocation7 + $0x78] sm:$0xf]
    %v602 = vld [vmem:[#allocation7 + $0x7c] sm:$0xf]
    %v603 = vld [vmem:[%s4] sm:$0x1]
    %v605 = vlaneseq
    %v606 = vshrl.u32 %v605, 7
    %v607 = vsub.s32 0, %v606
    %v608 = vrot.slane %v603, %v607
    %v642 = vunpack.c.l.b16 %v571
    %v643 = vunpack.c.l.b16 %v572
    %v644 = vunpack.c.l.b16 %v573
    %v645 = vunpack.c.l.b16 %v574
    %v646 = vunpack.c.l.b16 %v575
    %v647 = vunpack.c.l.b16 %v576
    %v648 = vunpack.c.l.b16 %v577
    %v649 = vunpack.c.l.b16 %v578
    %v650 = vunpack.c.l.b16 %v579
    %v651 = vunpack.c.l.b16 %v580
    %v652 = vunpack.c.l.b16 %v581
    %v653 = vunpack.c.l.b16 %v582
    %v654 = vunpack.c.l.b16 %v583
    %v655 = vunpack.c.l.b16 %v584
    %v656 = vunpack.c.l.b16 %v585
    %v657 = vunpack.c.l.b16 %v586
    %v658 = vunpack.c.l.b16 %v587
    %v659 = vunpack.c.l.b16 %v588
    %v660 = vunpack.c.l.b16 %v589
    %v661 = vunpack.c.l.b16 %v590
    %v662 = vunpack.c.l.b16 %v591
    %v663 = vunpack.c.l.b16 %v592
    %v664 = vunpack.c.l.b16 %v593
    %v665 = vunpack.c.l.b16 %v594
    %v666 = vunpack.c.l.b16 %v595
    %v667 = vunpack.c.l.b16 %v596
    %v668 = vunpack.c.l.b16 %v597
    %v669 = vunpack.c.l.b16 %v598
    %v670 = vunpack.c.l.b16 %v599
    %v671 = vunpack.c.l.b16 %v600
    %v672 = vunpack.c.l.b16 %v601
    %v673 = vunpack.c.l.b16 %v602
    %v674 = vpack.c.b16 %v643, %v642
    %v675 = vpack.c.b16 %v645, %v644
    %v676 = vpack.c.b16 %v647, %v646
    %v677 = vpack.c.b16 %v649, %v648
    %v678 = vpack.c.b16 %v651, %v650
    %v679 = vpack.c.b16 %v653, %v652
    %v680 = vpack.c.b16 %v655, %v654
    %v681 = vpack.c.b16 %v657, %v656
    %v682 = vpack.c.b16 %v659, %v658
    %v683 = vpack.c.b16 %v661, %v660
    %v684 = vpack.c.b16 %v663, %v662
    %v685 = vpack.c.b16 %v665, %v664
    %v686 = vpack.c.b16 %v667, %v666
    %v687 = vpack.c.b16 %v669, %v668
    %v688 = vpack.c.b16 %v671, %v670
    %v689 = vpack.c.b16 %v673, %v672
    %706 = vmatprep.subr.bf16.mxu0 0
    %707 = vmatpush1.bf16.msra.mxu0 %v674
    %708 = vmatprep.subr.bf16.mxu0 0
    %709 = vmatpush1.bf16.msra.mxu0 %v675
    %710 = vmatprep.subr.bf16.mxu0 0
    %711 = vmatpush1.bf16.msra.mxu0 %v676
    %712 = vmatprep.subr.bf16.mxu0 0
    %713 = vmatpush1.bf16.msra.mxu0 %v677
    %714 = vmatprep.subr.bf16.mxu0 0
    %715 = vmatpush1.bf16.msra.mxu0 %v678
    %716 = vmatprep.subr.bf16.mxu0 0
    %717 = vmatpush1.bf16.msra.mxu0 %v679
    %718 = vmatprep.subr.bf16.mxu0 0
    %719 = vmatpush1.bf16.msra.mxu0 %v680
    %720 = vmatprep.subr.bf16.mxu0 0
    %721 = vmatpush1.bf16.msra.mxu0 %v681
    %722 = vmatprep.subr.bf16.mxu0 0
    %723 = vmatpush1.bf16.msra.mxu0 %v682
    %724 = vmatprep.subr.bf16.mxu0 0
    %725 = vmatpush1.bf16.msra.mxu0 %v683
    %726 = vmatprep.subr.bf16.mxu0 0
    %727 = vmatpush1.bf16.msra.mxu0 %v684
    %728 = vmatprep.subr.bf16.mxu0 0
    %729 = vmatpush1.bf16.msra.mxu0 %v685
    %730 = vmatprep.subr.bf16.mxu0 0
    %731 = vmatpush1.bf16.msra.mxu0 %v686
    %732 = vmatprep.subr.bf16.mxu0 0
    %733 = vmatpush1.bf16.msra.mxu0 %v687
    %734 = vmatprep.subr.bf16.mxu0 0
    %735 = vmatpush1.bf16.msra.mxu0 %v688
    %736 = vmatprep.subr.bf16.mxu0 0
    %737 = vmatpush1.bf16.msra.mxu0 %v689
    %738 = vmatprep.mubr.bf16.mxu0 %v570
    %739 = vmatmul.mubr.bf16.gmra.mrb[0].mxu0 %v569
    %v740 = vpop.f32.mrb[0].mxu0
    %v741 = vadd.f32 %v608, %v740
    %v742 = vpop.f32.mrb[0].mxu0
    %v743 = vpop.f32.mrb[0].mxu0
    %v744 = vpop.f32.mrb[0].mxu0
    %745 = vdwg.mxu0
    %v746 = vtanh.pop %v741
    %v747 = vpack.c.bf16 %v746, %v746
    %v748 = vld [vmem:[#allocation8] sm:$0xf]
    %v749 = vld [vmem:[#allocation8 + $0x4] sm:$0xf]
    %v750 = vld [vmem:[#allocation8 + $0x8] sm:$0xf]
    %v751 = vld [vmem:[#allocation8 + $0xc] sm:$0xf]
    %v752 = vld [vmem:[#allocation8 + $0x10] sm:$0xf]
    %v753 = vld [vmem:[#allocation8 + $0x14] sm:$0xf]
    %v754 = vld [vmem:[#allocation8 + $0x18] sm:$0xf]
    %v755 = vld [vmem:[#allocation8 + $0x1c] sm:$0xf]
    %v756 = vld [vmem:[#allocation8 + $0x20] sm:$0xf]
    %v757 = vld [vmem:[#allocation8 + $0x24] sm:$0xf]
    %v758 = vld [vmem:[#allocation8 + $0x28] sm:$0xf]
    %v759 = vld [vmem:[#allocation8 + $0x2c] sm:$0xf]
    %v760 = vld [vmem:[#allocation8 + $0x30] sm:$0xf]
    %v761 = vld [vmem:[#allocation8 + $0x34] sm:$0xf]
    %v762 = vld [vmem:[#allocation8 + $0x38] sm:$0xf]
    %v763 = vld [vmem:[#allocation8 + $0x3c] sm:$0xf]
    %v764 = vld [vmem:[%s6] sm:$0x1]
    %v766 = vlaneseq
    %v767 = vshrl.u32 %v766, 7
    %v768 = vsub.s32 0, %v767
    %v769 = vrot.slane %v764, %v768
    %v787 = vunpack.c.l.b16 %v748
    %v788 = vunpack.c.l.b16 %v749
    %v789 = vunpack.c.l.b16 %v750
    %v790 = vunpack.c.l.b16 %v751
    %v791 = vunpack.c.l.b16 %v752
    %v792 = vunpack.c.l.b16 %v753
    %v793 = vunpack.c.l.b16 %v754
    %v794 = vunpack.c.l.b16 %v755
    %v795 = vunpack.c.l.b16 %v756
    %v796 = vunpack.c.l.b16 %v757
    %v797 = vunpack.c.l.b16 %v758
    %v798 = vunpack.c.l.b16 %v759
    %v799 = vunpack.c.l.b16 %v760
    %v800 = vunpack.c.l.b16 %v761
    %v801 = vunpack.c.l.b16 %v762
    %v802 = vunpack.c.l.b16 %v763
    %v803 = vpack.c.b16 %v788, %v787
    %v804 = vpack.c.b16 %v790, %v789
    %v805 = vpack.c.b16 %v792, %v791
    %v806 = vpack.c.b16 %v794, %v793
    %v807 = vpack.c.b16 %v796, %v795
    %v808 = vpack.c.b16 %v798, %v797
    %v809 = vpack.c.b16 %v800, %v799
    %v810 = vpack.c.b16 %v802, %v801
    %819 = vmatprep.subr.bf16.mxu0 0
    %820 = vmatpush1.bf16.msra.mxu0 %v803
    %821 = vmatprep.subr.bf16.mxu0 0
    %822 = vmatpush1.bf16.msra.mxu0 %v804
    %823 = vmatprep.subr.bf16.mxu0 0
    %824 = vmatpush1.bf16.msra.mxu0 %v805
    %825 = vmatprep.subr.bf16.mxu0 0
    %826 = vmatpush1.bf16.msra.mxu0 %v806
    %827 = vmatprep.subr.bf16.mxu0 0
    %828 = vmatpush1.bf16.msra.mxu0 %v807
    %829 = vmatprep.subr.bf16.mxu0 0
    %830 = vmatpush1.bf16.msra.mxu0 %v808
    %831 = vmatprep.subr.bf16.mxu0 0
    %832 = vmatpush1.bf16.msra.mxu0 %v809
    %833 = vmatprep.subr.bf16.mxu0 0
    %834 = vmatpush1.bf16.msra.mxu0 %v810
    %835 = vmatprep.subr.bf16.mxu0 0
    %836 = vmatpush1.bf16.msra.mxu0 0
    %837 = vmatprep.subr.bf16.mxu0 0
    %838 = vmatpush1.bf16.msra.mxu0 0
    %839 = vmatprep.subr.bf16.mxu0 0
    %840 = vmatpush1.bf16.msra.mxu0 0
    %841 = vmatprep.subr.bf16.mxu0 0
    %842 = vmatpush1.bf16.msra.mxu0 0
    %843 = vmatprep.subr.bf16.mxu0 0
    %844 = vmatpush1.bf16.msra.mxu0 0
    %845 = vmatprep.subr.bf16.mxu0 0
    %846 = vmatpush1.bf16.msra.mxu0 0
    %847 = vmatprep.subr.bf16.mxu0 0
    %848 = vmatpush1.bf16.msra.mxu0 0
    %849 = vmatprep.subr.bf16.mxu0 0
    %850 = vmatpush1.bf16.msra.mxu0 0
    %851 = vmatprep.mubr.bf16.mxu0 0
    %852 = vmatmul.mubr.bf16.gmra.mrb[0].mxu0 %v747
    %v853 = vpop.f32.mrb[0].mxu0
    %v854 = vadd.f32 %v769, %v853
    %v855 = vpop.f32.mrb[0].mxu0
    %v856 = vpop.f32.mrb[0].mxu0
    %v857 = vpop.f32.mrb[0].mxu0
    %858 = vdwg.mxu0
    %v859 = vpack.c.bf16 %v854, %v854
    %860 = vst [vmem:[#allocation10] sm:$0xf] %v859
    // Predicated region
    $region46: #{tpu_custom_call.1} parent=1 // pred_check
      _
    $region47: #{tpu_custom_call.1} parent=1 // pred_check_branch
      %862 = sbr.rel (0) target = $region49
    $region48: #{tpu_custom_call.1} parent=1 // pred_region
      %s864 = ssub.s32 64, 64
      %865 = vsyncadd [#allocation4], %s864
      %s867 = sshll.u32 [#allocation10], 4
      %s868 = int_to_ptr.vmem [resolvable:$true] %s867
      %870 = dma.vmem_to_hbm [thread:$0]  %s868, 64, %s7, [#allocation4]
    $region49: #{tpu_custom_call.1} parent=1 // pred_fallthru
      _
    // Predicated region
    $region50: #{tpu_custom_call.1} parent=1 // pred_check
      _
    $region51: #{tpu_custom_call.1} parent=1 // pred_check_branch
      %872 = sbr.rel (0) target = $region53
    $region52: #{tpu_custom_call.1} parent=1 // pred_region
      %873 = dma.done [#allocation4], 64
    $region53: #{tpu_custom_call.1} parent=1 // pred_fallthru
      _
    %874 = vsyncpa [#allocation3], 1
    %875 = vsyncpa [#allocation6], 1
    %876 = vsyncpa [#allocation9], 1
    %877 = vsyncpa [#allocation4], 1

</llo_original>
